<compile_context>
chip_gen: v7x
topology: tpu7x:2x2x1
jax: 0.10.0
libtpu: 0.0.40
codegen_flags: <defaults>
</compile_context>

<pallas_src>
import functools

import jax
import jax.numpy as jnp
from jax import lax
from jax.experimental import pallas as pl
from jax.experimental.pallas import tpu as pltpu


def _lane_padded_cin(c, w, lane=128):
    """Smallest c_pad >= c making w*c_pad a multiple of the 128-lane width.

    Only pads when the padded row stays small (<= max(2*w*c, lane)); otherwise
    returns c unchanged (the BlockSpec still works, just with masked lanes).
    """
    if (w * c) % lane == 0:
        return c
    for c_pad in range(c + 1, c + lane + 1):
        if (w * c_pad) % lane == 0 and w * c_pad <= max(2 * w * c, lane):
            return c_pad
    return c


def _pack_banded_weight(w, w_in, padding):
    """Pack a (K, K, Cin, Cout) conv kernel into a banded (K*W_in*Cin, W_out*Cout) matrix.

    Row index    = dy * (W_in*Cin) + xin * Cin + cin
    Column index = xout * Cout + cout
    Entry        = w[dy, xin - xout + padding, cin, cout] when that dx is in
                   [0, K), else exactly 0.
    Horizontal taps and horizontal zero-padding are folded into the weight, so
    the kernel only needs K vertically shifted rows of the activation.
    Built with where/broadcast only (no matmul) so entries are bit-exact.
    """
    k, _, cin, cout = w.shape
    w_out = w_in + 2 * padding - k + 1
    xin = jnp.arange(w_in)
    xout = jnp.arange(w_out)
    pieces = []
    for dx in range(k):
        m = xin[:, None] == (xout[None, :] + dx - padding)          # (W_in, W_out)
        pieces.append(jnp.where(m[None, :, None, :, None],
                                w[:, dx][:, None, :, None, :], 0.0))
    banded = sum(pieces)                                            # (K, W_in, Cin, W_out, Cout)
    return banded.reshape(k * w_in * cin, w_out * cout)


def _shortcut_stack_kernel(*refs, layer_dims, relus, n_layers, n_batch,
                           compute_dtype):
    """Fused forward of the whole conv stack for the whole batch (one grid step).

    refs = (x_ref, w_0, b_0, ..., w_{L-1}, b_{L-1}, o_ref)
      x_ref : (N*H0, W0*C0)                activation, compute_dtype
      w_i   : (K*W_in*C_in, W_out*C_out)   banded weight, compute_dtype
      b_i   : (1, W_out*C_out)             bias row, float32
      o_ref : (N*H_L, W_L*C_L)             final output (lane-dense)
    """
    x_ref = refs[0]
    o_ref = refs[1 + 2 * n_layers]

    act = x_ref[...]                                   # (N*H0, W0*C0)
    acc = None
    for i, (h_in, w_in, c_in, k, p, h_out, w_out, c_out) in enumerate(layer_dims):
        w_ref = refs[1 + 2 * i]
        b_ref = refs[2 + 2 * i]
        wc = w_in * c_in

        if k == 1 and p == 0:
            # 1x1, no padding: the activation already IS the matmul operand.
            a_mat = act
        else:
            # Build the (N*H_out, K*W_in*C_in) operand as a value: per-image
            # vertical zero-padding, then K row-shifted slabs side by side
            # along the lane axis (horizontal taps + horizontal padding live
            # in the banded weight).  No scratch store/reload.
            zrows = jnp.zeros((p, wc), dtype=compute_dtype) if p > 0 else None
            per_image = []
            for b in range(n_batch):
                img = act[b * h_in:(b + 1) * h_in, :]
                pad = img if p == 0 else jnp.concatenate([zrows, img, zrows],
                                                         axis=0)
                if k > 1:
                    pad = jnp.concatenate(
                        [pad[dy:dy + h_out, :] for dy in range(k)], axis=1)
                per_image.append(pad)
            a_mat = (per_image[0] if n_batch == 1
                     else jnp.concatenate(per_image, axis=0))

        # One MXU matmul per layer for the whole batch; f32 acc, bias, ReLU.
        acc = jnp.dot(a_mat, w_ref[...], preferred_element_type=jnp.float32)
        acc = acc + b_ref[...]
        if relus[i]:
            acc = jnp.maximum(acc, 0.0)
        if i + 1 < n_layers:
            act = acc.astype(compute_dtype)

    o_ref[...] = acc.astype(o_ref.dtype)


def shortcut_conv2d_forward(x_nchw, params, paddings, relus,
                            compute_dtype=jnp.bfloat16):
    """Forward pass of the full ShortcutConv2d stack as one Pallas call."""
    n, c0, h0, w0 = x_nchw.shape
    out_dtype = x_nchw.dtype

    # Lane-density: zero-pad the first layer's Cin so W0*Cin is a multiple of
    # 128.  Padded channels are zero in activation AND weight -> exact result.
    c0p = _lane_padded_cin(c0, w0)

    # Static per-layer geometry + packed 2-D operands.
    layer_dims = []
    flat_inputs = []
    h, w, c = h0, w0, c0p
    for li, ((wk, bk), p) in enumerate(zip(params, paddings)):
        k = wk.shape[0]
        c_out = wk.shape[3]
        h_out = h + 2 * p - k + 1
        w_out = w + 2 * p - k + 1
        layer_dims.append((h, w, c, k, p, h_out, w_out, c_out))

        if li == 0 and c != wk.shape[2]:
            wk = jnp.pad(wk, ((0, 0), (0, 0), (0, c - wk.shape[2]), (0, 0)))
        w_packed = _pack_banded_weight(wk, w, p).astype(compute_dtype)
        b_row = jnp.tile(bk.astype(jnp.float32),
                         (w_out,)).reshape(1, w_out * c_out)
        flat_inputs += [w_packed, b_row]
        h, w, c = h_out, w_out, c_out
    h_l, w_l, c_l = h, w, c

    # NCHW -> NHWC (+ zero channel pad) -> (N*H, W*C): channels ride the lane
    # dim together with W; batch rides the matmul M dim together with H.
    # TODO(synk): if the surrounding model can produce/consume NHWC (H, W*C)
    # directly, drop these boundary transposes — at these sizes they rival the
    # kernel's own runtime.
    x_nhwc = jnp.transpose(x_nchw, (0, 2, 3, 1))
    if c0p != c0:
        x_nhwc = jnp.pad(x_nhwc, ((0, 0), (0, 0), (0, 0), (0, c0p - c0)))
    x2d = x_nhwc.reshape(n * h0, w0 * c0p).astype(compute_dtype)

    in_specs = [pl.BlockSpec((n * h0, w0 * c0p), lambda i: (0, 0))]
    for op in flat_inputs:
        in_specs.append(pl.BlockSpec(op.shape, lambda i: (0, 0)))

    kern = functools.partial(
        _shortcut_stack_kernel,
        layer_dims=tuple(layer_dims),
        relus=tuple(bool(r) for r in relus),
        n_layers=len(layer_dims),
        n_batch=n,
        compute_dtype=compute_dtype,
    )

    out2d = pl.pallas_call(
        kern,
        out_shape=jax.ShapeDtypeStruct((n * h_l, w_l * c_l), out_dtype),
        grid_spec=pltpu.PrefetchScalarGridSpec(
            num_scalar_prefetch=0,
            grid=(1,),                      # batch folded into matmul M
            in_specs=in_specs,
            out_specs=pl.BlockSpec((n * h_l, w_l * c_l), lambda i: (0, 0)),
        ),
        compiler_params=pltpu.CompilerParams(
            dimension_semantics=("arbitrary",)),
    )(x2d, *flat_inputs)

    out = out2d.reshape(n, h_l, w_l, c_l)
    return jnp.transpose(out, (0, 3, 1, 2))    # back to NCHW


class ShortcutConv2dPallas:
    """JAX/Pallas port of ShortcutConv2d (Conv2d+ReLU stack) fused in one TPU kernel.

    Weights use PyTorch-style uniform fan-in init from an explicit PRNG key.
    Matmuls run in `compute_dtype` (bf16 by default) with float32 accumulation.
    """

    def __init__(self, in_channels, out_channels, kernel_sizes, paddings,
                 activation_last=False, key=None, compute_dtype=jnp.bfloat16):
        assert len(kernel_sizes) == len(paddings)
        key = jax.random.PRNGKey(0) if key is None else key
        self.params = []
        self.paddings = list(paddings)
        self.relus = []
        self.compute_dtype = compute_dtype
        for i, (k, p) in enumerate(zip(kernel_sizes, paddings)):
            inc = in_channels if i == 0 else out_channels
            key, wk, bk = jax.random.split(key, 3)
            fan_in = inc * k * k
            bound = 1.0 / (fan_in ** 0.5)
            w = jax.random.uniform(wk, (k, k, inc, out_channels),
                                   jnp.float32, -bound, bound)
            b = jax.random.uniform(bk, (out_channels,),
                                   jnp.float32, -bound, bound)
            self.params.append((w, b))
            self.relus.append(i < len(kernel_sizes) - 1 or activation_last)

    def __call__(self, x_nchw):
        return shortcut_conv2d_forward(
            x_nchw, self.params, self.paddings, self.relus,
            compute_dtype=self.compute_dtype)


def _reference(mod, x_nchw, cast_to_compute=True):
    """Pure-JAX reference (lax conv) matching the PyTorch forward.

    With cast_to_compute=True, activations/weights are rounded to the module's
    compute dtype before each conv (f32 accumulation), mirroring the kernel's
    precision choices so only summation order differs.
    """
    dt = mod.compute_dtype if cast_to_compute else x_nchw.dtype
    y = x_nchw
    for (w, b), p, relu in zip(mod.params, mod.paddings, mod.relus):
        w_oihw = jnp.transpose(w, (3, 2, 0, 1)).astype(dt)
        y = lax.conv_general_dilated(
            y.astype(dt), w_oihw, window_strides=(1, 1),
            padding=[(p, p), (p, p)],
            dimension_numbers=("NCHW", "OIHW", "NCHW"),
            preferred_element_type=jnp.float32,
            precision=lax.Precision.HIGHEST)
        y = y + b[None, :, None, None]
        if relu:
            y = jnp.maximum(y, 0.0)
    return y


if __name__ == "__main__":
    x = jax.random.normal(jax.random.PRNGKey(0), (2, 4, 16, 16), jnp.float32)  # NCHW

    # Typical TTFNet shortcut config: two 3x3 convs + one 1x1 conv, ReLU between.
    mod = ShortcutConv2dPallas(
        in_channels=4, out_channels=8,
        kernel_sizes=(3, 3, 1), paddings=(1, 1, 0),
        activation_last=False, key=jax.random.PRNGKey(1))

    y = mod(x)
    jax.block_until_ready(y)
    assert y.shape == (2, 8, 16, 16), y.shape

    # Check 1: reference using the same bf16 operand rounding (f32 accumulation
    # on both sides) -> differences are only accumulation-order noise.
    y_ref_bf16 = _reference(mod, x, cast_to_compute=True)
    err = float(jnp.max(jnp.abs(y - y_ref_bf16)))
    assert jnp.allclose(y, y_ref_bf16, atol=5e-3, rtol=5e-3), err

    # Check 2: coarse sanity check against the full-f32 reference
    # (bf16 compute => loose tolerance).
    y_ref_f32 = _reference(mod, x, cast_to_compute=False)
    err32 = float(jnp.max(jnp.abs(y - y_ref_f32)))
    assert jnp.allclose(y, y_ref_f32, atol=1e-1, rtol=1e-1), err32

    print("KERNEL_OK")
</pallas_src>

<mosaic_0001>
module attributes {stable_mosaic.version = 11 : i64} {
  func.func @_shortcut_stack_kernel(%arg0: i32, %arg1: memref<32x128xbf16, #tpu.memory_space<vmem>>, %arg2: memref<384x128xbf16, #tpu.memory_space<vmem>>, %arg3: memref<1x128xf32, #tpu.memory_space<vmem>>, %arg4: memref<384x128xbf16, #tpu.memory_space<vmem>>, %arg5: memref<1x128xf32, #tpu.memory_space<vmem>>, %arg6: memref<128x128xbf16, #tpu.memory_space<vmem>>, %arg7: memref<1x128xf32, #tpu.memory_space<vmem>>, %arg8: memref<32x128xf32, #tpu.memory_space<vmem>>) attributes {dimension_semantics = [#tpu.dimension_semantics<arbitrary>], iteration_bounds = array<i64: 1>, scalar_prefetch = 0 : i64, scratch_operands = 0 : i64, tpu.core_type = #tpu.core_type<tc>, window_params = [{pipeline_mode = #tpu.pipeline_mode<synchronous>, transform_indices = @transform_0, window_bounds = array<i64: 32, 128>}, {pipeline_mode = #tpu.pipeline_mode<synchronous>, transform_indices = @transform_1, window_bounds = array<i64: 384, 128>}, {pipeline_mode = #tpu.pipeline_mode<synchronous>, transform_indices = @transform_2, window_bounds = array<i64: 1, 128>}, {pipeline_mode = #tpu.pipeline_mode<synchronous>, transform_indices = @transform_3, window_bounds = array<i64: 384, 128>}, {pipeline_mode = #tpu.pipeline_mode<synchronous>, transform_indices = @transform_4, window_bounds = array<i64: 1, 128>}, {pipeline_mode = #tpu.pipeline_mode<synchronous>, transform_indices = @transform_5, window_bounds = array<i64: 128, 128>}, {pipeline_mode = #tpu.pipeline_mode<synchronous>, transform_indices = @transform_6, window_bounds = array<i64: 1, 128>}, {pipeline_mode = #tpu.pipeline_mode<synchronous>, transform_indices = @transform_7, window_bounds = array<i64: 32, 128>}]} {
    %c0 = arith.constant 0 : index
    %c0_0 = arith.constant 0 : index
    %0 = vector.load %arg1[%c0, %c0_0] : memref<32x128xbf16, #tpu.memory_space<vmem>>, vector<32x128xbf16>
    %cst = arith.constant 0.000000e+00 : bf16
    %1 = vector.broadcast %cst : bf16 to vector<1x128xbf16>
    %2 = vector.extract_strided_slice %0 {offsets = [0, 0], sizes = [16, 128], strides = [1, 1]} : vector<32x128xbf16> to vector<16x128xbf16>
    %3 = tpu.concatenate %1, %2, %1 in 0 : vector<1x128xbf16>, vector<16x128xbf16>, vector<1x128xbf16> -> vector<18x128xbf16>
    %4 = vector.extract_strided_slice %3 {offsets = [0, 0], sizes = [16, 128], strides = [1, 1]} : vector<18x128xbf16> to vector<16x128xbf16>
    %5 = vector.extract_strided_slice %3 {offsets = [1, 0], sizes = [16, 128], strides = [1, 1]} : vector<18x128xbf16> to vector<16x128xbf16>
    %6 = vector.extract_strided_slice %3 {offsets = [2, 0], sizes = [16, 128], strides = [1, 1]} : vector<18x128xbf16> to vector<16x128xbf16>
    %7 = tpu.concatenate %4, %5, %6 in 1 : vector<16x128xbf16>, vector<16x128xbf16>, vector<16x128xbf16> -> vector<16x384xbf16>
    %8 = vector.extract_strided_slice %0 {offsets = [16, 0], sizes = [16, 128], strides = [1, 1]} : vector<32x128xbf16> to vector<16x128xbf16>
    %9 = tpu.concatenate %1, %8, %1 in 0 : vector<1x128xbf16>, vector<16x128xbf16>, vector<1x128xbf16> -> vector<18x128xbf16>
    %10 = vector.extract_strided_slice %9 {offsets = [0, 0], sizes = [16, 128], strides = [1, 1]} : vector<18x128xbf16> to vector<16x128xbf16>
    %11 = vector.extract_strided_slice %9 {offsets = [1, 0], sizes = [16, 128], strides = [1, 1]} : vector<18x128xbf16> to vector<16x128xbf16>
    %12 = vector.extract_strided_slice %9 {offsets = [2, 0], sizes = [16, 128], strides = [1, 1]} : vector<18x128xbf16> to vector<16x128xbf16>
    %13 = tpu.concatenate %10, %11, %12 in 1 : vector<16x128xbf16>, vector<16x128xbf16>, vector<16x128xbf16> -> vector<16x384xbf16>
    %14 = tpu.concatenate %7, %13 in 0 : vector<16x384xbf16>, vector<16x384xbf16> -> vector<32x384xbf16>
    %c0_1 = arith.constant 0 : index
    %c0_2 = arith.constant 0 : index
    %15 = vector.load %arg2[%c0_1, %c0_2] : memref<384x128xbf16, #tpu.memory_space<vmem>>, vector<384x128xbf16>
    %cst_3 = arith.constant dense<0.000000e+00> : vector<32x128xf32>
    %16 = tpu.matmul %14, %15, %cst_3 {dimension_numbers = #tpu.dot_dimension_numbers<[1], [0], [0], [1], [0, 0, 1, 1], [], []>} : vector<32x384xbf16>, vector<384x128xbf16>, vector<32x128xf32> -> vector<32x128xf32>
    %c0_4 = arith.constant 0 : index
    %c0_5 = arith.constant 0 : index
    %17 = vector.load %arg3[%c0_4, %c0_5] : memref<1x128xf32, #tpu.memory_space<vmem>>, vector<1x128xf32>
    %18 = vector.broadcast %17 : vector<1x128xf32> to vector<32x128xf32>
    %19 = arith.addf %16, %18 : vector<32x128xf32>
    %cst_6 = arith.constant 0.000000e+00 : f32
    %20 = vector.broadcast %cst_6 : f32 to vector<32x128xf32>
    %21 = arith.maximumf %19, %20 : vector<32x128xf32>
    %22 = arith.truncf %21 : vector<32x128xf32> to vector<32x128xbf16>
    %cst_7 = arith.constant 0.000000e+00 : bf16
    %23 = vector.broadcast %cst_7 : bf16 to vector<1x128xbf16>
    %24 = vector.extract_strided_slice %22 {offsets = [0, 0], sizes = [16, 128], strides = [1, 1]} : vector<32x128xbf16> to vector<16x128xbf16>
    %25 = tpu.concatenate %23, %24, %23 in 0 : vector<1x128xbf16>, vector<16x128xbf16>, vector<1x128xbf16> -> vector<18x128xbf16>
    %26 = vector.extract_strided_slice %25 {offsets = [0, 0], sizes = [16, 128], strides = [1, 1]} : vector<18x128xbf16> to vector<16x128xbf16>
    %27 = vector.extract_strided_slice %25 {offsets = [1, 0], sizes = [16, 128], strides = [1, 1]} : vector<18x128xbf16> to vector<16x128xbf16>
    %28 = vector.extract_strided_slice %25 {offsets = [2, 0], sizes = [16, 128], strides = [1, 1]} : vector<18x128xbf16> to vector<16x128xbf16>
    %29 = tpu.concatenate %26, %27, %28 in 1 : vector<16x128xbf16>, vector<16x128xbf16>, vector<16x128xbf16> -> vector<16x384xbf16>
    %30 = vector.extract_strided_slice %22 {offsets = [16, 0], sizes = [16, 128], strides = [1, 1]} : vector<32x128xbf16> to vector<16x128xbf16>
    %31 = tpu.concatenate %23, %30, %23 in 0 : vector<1x128xbf16>, vector<16x128xbf16>, vector<1x128xbf16> -> vector<18x128xbf16>
    %32 = vector.extract_strided_slice %31 {offsets = [0, 0], sizes = [16, 128], strides = [1, 1]} : vector<18x128xbf16> to vector<16x128xbf16>
    %33 = vector.extract_strided_slice %31 {offsets = [1, 0], sizes = [16, 128], strides = [1, 1]} : vector<18x128xbf16> to vector<16x128xbf16>
    %34 = vector.extract_strided_slice %31 {offsets = [2, 0], sizes = [16, 128], strides = [1, 1]} : vector<18x128xbf16> to vector<16x128xbf16>
    %35 = tpu.concatenate %32, %33, %34 in 1 : vector<16x128xbf16>, vector<16x128xbf16>, vector<16x128xbf16> -> vector<16x384xbf16>
    %36 = tpu.concatenate %29, %35 in 0 : vector<16x384xbf16>, vector<16x384xbf16> -> vector<32x384xbf16>
    %c0_8 = arith.constant 0 : index
    %c0_9 = arith.constant 0 : index
    %37 = vector.load %arg4[%c0_8, %c0_9] : memref<384x128xbf16, #tpu.memory_space<vmem>>, vector<384x128xbf16>
    %cst_10 = arith.constant dense<0.000000e+00> : vector<32x128xf32>
    %38 = tpu.matmul %36, %37, %cst_10 {dimension_numbers = #tpu.dot_dimension_numbers<[1], [0], [0], [1], [0, 0, 1, 1], [], []>} : vector<32x384xbf16>, vector<384x128xbf16>, vector<32x128xf32> -> vector<32x128xf32>
    %c0_11 = arith.constant 0 : index
    %c0_12 = arith.constant 0 : index
    %39 = vector.load %arg5[%c0_11, %c0_12] : memref<1x128xf32, #tpu.memory_space<vmem>>, vector<1x128xf32>
    %40 = vector.broadcast %39 : vector<1x128xf32> to vector<32x128xf32>
    %41 = arith.addf %38, %40 : vector<32x128xf32>
    %cst_13 = arith.constant 0.000000e+00 : f32
    %42 = vector.broadcast %cst_13 : f32 to vector<32x128xf32>
    %43 = arith.maximumf %41, %42 : vector<32x128xf32>
    %44 = arith.truncf %43 : vector<32x128xf32> to vector<32x128xbf16>
    %c0_14 = arith.constant 0 : index
    %c0_15 = arith.constant 0 : index
    %45 = vector.load %arg6[%c0_14, %c0_15] : memref<128x128xbf16, #tpu.memory_space<vmem>>, vector<128x128xbf16>
    %cst_16 = arith.constant dense<0.000000e+00> : vector<32x128xf32>
    %46 = tpu.matmul %44, %45, %cst_16 {dimension_numbers = #tpu.dot_dimension_numbers<[1], [0], [0], [1], [0, 0, 1, 1], [], []>} : vector<32x128xbf16>, vector<128x128xbf16>, vector<32x128xf32> -> vector<32x128xf32>
    %c0_17 = arith.constant 0 : index
    %c0_18 = arith.constant 0 : index
    %47 = vector.load %arg7[%c0_17, %c0_18] : memref<1x128xf32, #tpu.memory_space<vmem>>, vector<1x128xf32>
    %48 = vector.broadcast %47 : vector<1x128xf32> to vector<32x128xf32>
    %49 = arith.addf %46, %48 : vector<32x128xf32>
    %c0_19 = arith.constant 0 : index
    %c0_20 = arith.constant 0 : index
    %50 = vector.load %arg8[%c0_19, %c0_20] : memref<32x128xf32, #tpu.memory_space<vmem>>, vector<32x128xf32>
    tpu.vector_store %arg8[%c0_19, %c0_20], %49 {strides = array<i32>} : memref<32x128xf32, #tpu.memory_space<vmem>>, vector<32x128xf32>,
    return
  }
  func.func @transform_0(%arg0: i32) -> (i32, i32) {
    %c0_i32 = arith.constant 0 : i32
    %c0_i32_0 = arith.constant 0 : i32
    %c0_i32_1 = arith.constant 0 : i32
    return %c0_i32, %c0_i32_0 : i32, i32
  }
  func.func @transform_1(%arg0: i32) -> (i32, i32) {
    %c0_i32 = arith.constant 0 : i32
    %c0_i32_0 = arith.constant 0 : i32
    %c0_i32_1 = arith.constant 0 : i32
    return %c0_i32, %c0_i32_0 : i32, i32
  }
  func.func @transform_2(%arg0: i32) -> (i32, i32) {
    %c0_i32 = arith.constant 0 : i32
    %c0_i32_0 = arith.constant 0 : i32
    %c0_i32_1 = arith.constant 0 : i32
    return %c0_i32, %c0_i32_0 : i32, i32
  }
  func.func @transform_3(%arg0: i32) -> (i32, i32) {
    %c0_i32 = arith.constant 0 : i32
    %c0_i32_0 = arith.constant 0 : i32
    %c0_i32_1 = arith.constant 0 : i32
    return %c0_i32, %c0_i32_0 : i32, i32
  }
  func.func @transform_4(%arg0: i32) -> (i32, i32) {
    %c0_i32 = arith.constant 0 : i32
    %c0_i32_0 = arith.constant 0 : i32
    %c0_i32_1 = arith.constant 0 : i32
    return %c0_i32, %c0_i32_0 : i32, i32
  }
  func.func @transform_5(%arg0: i32) -> (i32, i32) {
    %c0_i32 = arith.constant 0 : i32
    %c0_i32_0 = arith.constant 0 : i32
    %c0_i32_1 = arith.constant 0 : i32
    return %c0_i32, %c0_i32_0 : i32, i32
  }
  func.func @transform_6(%arg0: i32) -> (i32, i32) {
    %c0_i32 = arith.constant 0 : i32
    %c0_i32_0 = arith.constant 0 : i32
    %c0_i32_1 = arith.constant 0 : i32
    return %c0_i32, %c0_i32_0 : i32, i32
  }
  func.func @transform_7(%arg0: i32) -> (i32, i32) {
    %c0_i32 = arith.constant 0 : i32
    %c0_i32_0 = arith.constant 0 : i32
    %c0_i32_1 = arith.constant 0 : i32
    return %c0_i32, %c0_i32_0 : i32, i32
  }
}

</mosaic_0001>

<llo_original>
// kernel: tpu_custom_call.1
$region0: #{tpu_custom_call.1}
  #allocation0 [shape = 'u32[]', space=smem, size = 0x4, offset = 0x4, fixed_abs, tag = 'smem constant byte address 0x4 - core index']
  #allocation1 [shape = 'u32[144,128]{1,0:T(1,128)}', space=vmem, size = 0x12000, scoped, tag = 'internal scratch']
  %s0 = inlined_call_operand.hbm [shape: bf16[32,128], index: 0, kind: input, shape index: {}]
  %s1 = inlined_call_operand.hbm [shape: bf16[384,128], index: 1, kind: input, shape index: {}]
  %s2 = inlined_call_operand.vmem [shape: f32[1,128], index: 2, kind: input, shape index: {}]
  %s3 = inlined_call_operand.hbm [shape: bf16[384,128], index: 3, kind: input, shape index: {}]
  %s4 = inlined_call_operand.vmem [shape: f32[1,128], index: 4, kind: input, shape index: {}]
  %s5 = inlined_call_operand.hbm [shape: bf16[128,128], index: 5, kind: input, shape index: {}]
  %s6 = inlined_call_operand.vmem [shape: f32[1,128], index: 6, kind: input, shape index: {}]
  %s7 = inlined_call_operand.hbm [shape: f32[32,128], index: 7, kind: output, shape index: {}]
  %s8 = sld [smem:[#allocation0]]
  $region54: #{tpu_custom_call.1} parent=0
    _
  %s10 = ssub.s32 1, %s8
  %s11 = scalar_select 0, %s10, %s8
  $region1: #{tpu_custom_call.1} parent=0
    #allocation2 [shape = 'u8[8192]{0}', space=vmem, size = 0x2000, scoped, tag = 'input window, operand 0, single buffered']
    #allocation3 [shape = 's32[1]{0}', space=sflag, size = 0x4, scoped, tag = 'scoped memory for tpu_custom_call.1']
    #allocation4 [shape = 's32[1]{0}', space=sflag, size = 0x4, scoped, tag = 'scoped memory for tpu_custom_call.1']
    #allocation5 [shape = 'u8[98304]{0}', space=vmem, size = 0x18000, scoped, tag = 'input window, operand 1, single buffered']
    #allocation6 [shape = 's32[1]{0}', space=sflag, size = 0x4, scoped, tag = 'scoped memory for tpu_custom_call.1']
    #allocation7 [shape = 'u8[98304]{0}', space=vmem, size = 0x18000, scoped, tag = 'input window, operand 3, single buffered']
    #allocation8 [shape = 'u8[32768]{0}', space=vmem, size = 0x8000, scoped, tag = 'input window, operand 5, single buffered']
    #allocation9 [shape = 's32[1]{0}', space=sflag, size = 0x4, scoped, tag = 'scoped memory for tpu_custom_call.1']
    #allocation10 [shape = 'u8[16384]{0}', space=vmem, size = 0x4000, scoped, tag = 'output window, operand 0, single buffered']
    %12 = vsyncpa [#allocation3], 0
    %13 = vsyncpa [#allocation6], 0
    %14 = vsyncpa [#allocation9], 0
    %15 = vsyncpa [#allocation4], 0
    // Predicated region
    $region2: #{tpu_custom_call.1} parent=1 // pred_check
      _
    $region3: #{tpu_custom_call.1} parent=1 // pred_check_branch
      %17 = sbr.rel (0) target = $region5
    $region4: #{tpu_custom_call.1} parent=1 // pred_region
      %s19 = ssub.s32 256, 256
      %20 = vsyncadd [#allocation3], %s19
      %s21 = sshll.u32 [#allocation2], 4
      %s22 = int_to_ptr.vmem [resolvable:$true] %s21
      %27 = dma.hbm_to_vmem [thread:$0]  %s0, 256, %s22, [#allocation3], 64, 64, 4
    $region5: #{tpu_custom_call.1} parent=1 // pred_fallthru
      _
    // Predicated region
    $region6: #{tpu_custom_call.1} parent=1 // pred_check
      _
    $region7: #{tpu_custom_call.1} parent=1 // pred_check_branch
      %29 = sbr.rel (0) target = $region9
    $region8: #{tpu_custom_call.1} parent=1 // pred_region
      %s31 = ssub.s32 3072, 3072
      %32 = vsyncadd [#allocation6], %s31
      %s33 = sshll.u32 [#allocation5], 4
      %s34 = int_to_ptr.vmem [resolvable:$true] %s33
      %39 = dma.hbm_to_vmem [thread:$0]  %s1, 3072, %s34, [#allocation6], 64, 64, 4
    $region9: #{tpu_custom_call.1} parent=1 // pred_fallthru
      _
    // Predicated region
    $region10: #{tpu_custom_call.1} parent=1 // pred_check
      _
    $region11: #{tpu_custom_call.1} parent=1 // pred_check_branch
      %41 = sbr.rel (0) target = $region13
    $region12: #{tpu_custom_call.1} parent=1 // pred_region
      _
    $region13: #{tpu_custom_call.1} parent=1 // pred_fallthru
      _
    // Predicated region
    $region14: #{tpu_custom_call.1} parent=1 // pred_check
      _
    $region15: #{tpu_custom_call.1} parent=1 // pred_check_branch
      %43 = sbr.rel (0) target = $region17
    $region16: #{tpu_custom_call.1} parent=1 // pred_region
      %s45 = ssub.s32 3072, 3072
      %46 = vsyncadd [#allocation6], %s45
      %s47 = sshll.u32 [#allocation7], 4
      %s48 = int_to_ptr.vmem [resolvable:$true] %s47
      %53 = dma.hbm_to_vmem [thread:$0]  %s3, 3072, %s48, [#allocation6], 64, 64, 4
    $region17: #{tpu_custom_call.1} parent=1 // pred_fallthru
      _
    // Predicated region
    $region18: #{tpu_custom_call.1} parent=1 // pred_check
      _
    $region19: #{tpu_custom_call.1} parent=1 // pred_check_branch
      %55 = sbr.rel (0) target = $region21
    $region20: #{tpu_custom_call.1} parent=1 // pred_region
      _
    $region21: #{tpu_custom_call.1} parent=1 // pred_fallthru
      _
    // Predicated region
    $region22: #{tpu_custom_call.1} parent=1 // pred_check
      _
    $region23: #{tpu_custom_call.1} parent=1 // pred_check_branch
      %57 = sbr.rel (0) target = $region25
    $region24: #{tpu_custom_call.1} parent=1 // pred_region
      %s59 = ssub.s32 1024, 1024
      %60 = vsyncadd [#allocation9], %s59
      %s61 = sshll.u32 [#allocation8], 4
      %s62 = int_to_ptr.vmem [resolvable:$true] %s61
      %67 = dma.hbm_to_vmem [thread:$0]  %s5, 1024, %s62, [#allocation9], 64, 64, 4
    $region25: #{tpu_custom_call.1} parent=1 // pred_fallthru
      _
    // Predicated region
    $region26: #{tpu_custom_call.1} parent=1 // pred_check
      _
    $region27: #{tpu_custom_call.1} parent=1 // pred_check_branch
      %69 = sbr.rel (0) target = $region29
    $region28: #{tpu_custom_call.1} parent=1 // pred_region
      _
    $region29: #{tpu_custom_call.1} parent=1 // pred_fallthru
      _
    // Predicated region
    $region30: #{tpu_custom_call.1} parent=1 // pred_check
      _
    $region31: #{tpu_custom_call.1} parent=1 // pred_check_branch
      %71 = sbr.rel (0) target = $region33
    $region32: #{tpu_custom_call.1} parent=1 // pred_region
      %72 = dma.done [#allocation3], 256
    $region33: #{tpu_custom_call.1} parent=1 // pred_fallthru
      _
    // Predicated region
    $region34: #{tpu_custom_call.1} parent=1 // pred_check
      _
    $region35: #{tpu_custom_call.1} parent=1 // pred_check_branch
      %74 = sbr.rel (0) target = $region37
    $region36: #{tpu_custom_call.1} parent=1 // pred_region
      %75 = dma.done [#allocation6], 3072
    $region37: #{tpu_custom_call.1} parent=1 // pred_fallthru
      _
    // Predicated region
    $region38: #{tpu_custom_call.1} parent=1 // pred_check
      _
    $region39: #{tpu_custom_call.1} parent=1 // pred_check_branch
      %77 = sbr.rel (0) target = $region41
    $region40: #{tpu_custom_call.1} parent=1 // pred_region
      %78 = dma.done [#allocation6], 3072
    $region41: #{tpu_custom_call.1} parent=1 // pred_fallthru
      _
    // Predicated region
    $region42: #{tpu_custom_call.1} parent=1 // pred_check
      _
    $region43: #{tpu_custom_call.1} parent=1 // pred_check_branch
      %80 = sbr.rel (0) target = $region45
    $region44: #{tpu_custom_call.1} parent=1 // pred_region
      %81 = dma.done [#allocation9], 1024
    $region45: #{tpu_custom_call.1} parent=1 // pred_fallthru
      _
    %v83 = vld [vmem:[#allocation2] sm:$0xf]
    %v84 = vld [vmem:[#allocation2 + $0x4] sm:$0xf]
    %v85 = vld [vmem:[#allocation2 + $0x8] sm:$0xf]
    %v86 = vld [vmem:[#allocation2 + $0xc] sm:$0xf]
    %v89 = vunpack.c.l.b16 %v83
    %v90 = vunpack.c.l.b16 %v84
    %v91 = vpack.c.b16 %v90, %v89
    %v93 = vshrl.u32 %v91, 16
    %v95 = vrot.slane %v93, 7
    %v96 = vshll.u32 %v91, 16
    %v98 = vor.u32 %v95, %v96
    %vm101 = vcmask 1040384
    %vm102 = vsmask.f32 256
    %vm103 = vmand %vm101, %vm102
    %v104 = vsel %vm103, 0, %v98
    %v105 = vsel %vm103, %v95, 0
    %vm106 = vsmask.f32 7424
    %v108 = vshrl.u32 %v104, 16
    %v110 = vshll.u32 %v104, 16
    %v112 = vrot.slane %v110, 1
    %v113 = vor.u32 %v108, %v112
    %v115 = vshll.u32 %v105, 16
    %v117 = vrot.slane %v115, 1
    %v118 = vsel %vm106, %v113, %v117
    %vm122 = vcmask 1046528
    %v123 = vrot.slane %v104, 1
    %v124 = vrot.slane %v105, 1
    %v125 = vsel %vm122, %v123, %v124
    %v129 = vunpack.c.l.b16 %v85
    %v130 = vunpack.c.l.b16 %v86
    %v131 = vpack.c.b16 %v130, %v129
    %v133 = vshrl.u32 %v131, 16
    %v135 = vrot.slane %v133, 7
    %v136 = vshll.u32 %v131, 16
    %v138 = vor.u32 %v135, %v136
    %v141 = vsel %vm103, 0, %v138
    %v142 = vsel %vm103, %v135, 0
    %v144 = vshrl.u32 %v141, 16
    %v146 = vshll.u32 %v141, 16
    %v148 = vrot.slane %v146, 1
    %v149 = vor.u32 %v144, %v148
    %v151 = vshll.u32 %v142, 16
    %v153 = vrot.slane %v151, 1
    %v154 = vsel %vm106, %v149, %v153
    %v158 = vrot.slane %v141, 1
    %v159 = vrot.slane %v142, 1
    %v160 = vsel %vm122, %v158, %v159
    %v162 = vld [vmem:[#allocation5] sm:$0xf]
    %v163 = vld [vmem:[#allocation5 + $0x4] sm:$0xf]
    %v164 = vld [vmem:[#allocation5 + $0x8] sm:$0xf]
    %v165 = vld [vmem:[#allocation5 + $0xc] sm:$0xf]
    %v166 = vld [vmem:[#allocation5 + $0x10] sm:$0xf]
    %v167 = vld [vmem:[#allocation5 + $0x14] sm:$0xf]
    %v168 = vld [vmem:[#allocation5 + $0x18] sm:$0xf]
    %v169 = vld [vmem:[#allocation5 + $0x1c] sm:$0xf]
    %v170 = vld [vmem:[#allocation5 + $0x20] sm:$0xf]
    %v171 = vld [vmem:[#allocation5 + $0x24] sm:$0xf]
    %v172 = vld [vmem:[#allocation5 + $0x28] sm:$0xf]
    %v173 = vld [vmem:[#allocation5 + $0x2c] sm:$0xf]
    %v174 = vld [vmem:[#allocation5 + $0x30] sm:$0xf]
    %v175 = vld [vmem:[#allocation5 + $0x34] sm:$0xf]
    %v176 = vld [vmem:[#allocation5 + $0x38] sm:$0xf]
    %v177 = vld [vmem:[#allocation5 + $0x3c] sm:$0xf]
    %v178 = vld [vmem:[#allocation5 + $0x40] sm:$0xf]
    %v179 = vld [vmem:[#allocation5 + $0x44] sm:$0xf]
    %v180 = vld [vmem:[#allocation5 + $0x48] sm:$0xf]
    %v181 = vld [vmem:[#allocation5 + $0x4c] sm:$0xf]
    %v182 = vld [vmem:[#allocation5 + $0x50] sm:$0xf]
    %v183 = vld [vmem:[#allocation5 + $0x54] sm:$0xf]
    %v184 = vld [vmem:[#allocation5 + $0x58] sm:$0xf]
    %v185 = vld [vmem:[#allocation5 + $0x5c] sm:$0xf]
    %v186 = vld [vmem:[#allocation5 + $0x60] sm:$0xf]
    %v187 = vld [vmem:[#allocation5 + $0x64] sm:$0xf]
    %v188 = vld [vmem:[#allocation5 + $0x68] sm:$0xf]
    %v189 = vld [vmem:[#allocation5 + $0x6c] sm:$0xf]
    %v190 = vld [vmem:[#allocation5 + $0x70] sm:$0xf]
    %v191 = vld [vmem:[#allocation5 + $0x74] sm:$0xf]
    %v192 = vld [vmem:[#allocation5 + $0x78] sm:$0xf]
    %v193 = vld [vmem:[#allocation5 + $0x7c] sm:$0xf]
    %v194 = vld [vmem:[#allocation5 + $0x80] sm:$0xf]
    %v195 = vld [vmem:[#allocation5 + $0x84] sm:$0xf]
    %v196 = vld [vmem:[#allocation5 + $0x88] sm:$0xf]
    %v197 = vld [vmem:[#allocation5 + $0x8c] sm:$0xf]
    %v198 = vld [vmem:[#allocation5 + $0x90] sm:$0xf]
    %v199 = vld [vmem:[#allocation5 + $0x94] sm:$0xf]
    %v200 = vld [vmem:[#allocation5 + $0x98] sm:$0xf]
    %v201 = vld [vmem:[#allocation5 + $0x9c] sm:$0xf]
    %v202 = vld [vmem:[#allocation5 + $0xa0] sm:$0xf]
    %v203 = vld [vmem:[#allocation5 + $0xa4] sm:$0xf]
    %v204 = vld [vmem:[#allocation5 + $0xa8] sm:$0xf]
    %v205 = vld [vmem:[#allocation5 + $0xac] sm:$0xf]
    %v206 = vld [vmem:[#allocation5 + $0xb0] sm:$0xf]
    %v207 = vld [vmem:[#allocation5 + $0xb4] sm:$0xf]
    %v208 = vld [vmem:[#allocation5 + $0xb8] sm:$0xf]
    %v209 = vld [vmem:[#allocation5 + $0xbc] sm:$0xf]
    %v210 = vld [vmem:[%s2] sm:$0x1]
    %v212 = vlaneseq
    %v213 = vshrl.u32 %v212, 7
    %v214 = vsub.s32 0, %v213
    %v215 = vrot.slane %v210, %v214
    %v265 = vunpack.c.l.b16 %v162
    %v266 = vunpack.c.l.b16 %v163
    %v267 = vunpack.c.l.b16 %v164
    %v268 = vunpack.c.l.b16 %v165
    %v269 = vunpack.c.l.b16 %v166
    %v270 = vunpack.c.l.b16 %v167
    %v271 = vunpack.c.l.b16 %v168
    %v272 = vunpack.c.l.b16 %v169
    %v273 = vunpack.c.l.b16 %v170
    %v274 = vunpack.c.l.b16 %v171
    %v275 = vunpack.c.l.b16 %v172
    %v276 = vunpack.c.l.b16 %v173
    %v277 = vunpack.c.l.b16 %v174
    %v278 = vunpack.c.l.b16 %v175
    %v279 = vunpack.c.l.b16 %v176
    %v280 = vunpack.c.l.b16 %v177
    %v281 = vunpack.c.l.b16 %v178
    %v282 = vunpack.c.l.b16 %v179
    %v283 = vunpack.c.l.b16 %v180
    %v284 = vunpack.c.l.b16 %v181
    %v285 = vunpack.c.l.b16 %v182
    %v286 = vunpack.c.l.b16 %v183
    %v287 = vunpack.c.l.b16 %v184
    %v288 = vunpack.c.l.b16 %v185
    %v289 = vunpack.c.l.b16 %v186
    %v290 = vunpack.c.l.b16 %v187
    %v291 = vunpack.c.l.b16 %v188
    %v292 = vunpack.c.l.b16 %v189
    %v293 = vunpack.c.l.b16 %v190
    %v294 = vunpack.c.l.b16 %v191
    %v295 = vunpack.c.l.b16 %v192
    %v296 = vunpack.c.l.b16 %v193
    %v297 = vunpack.c.l.b16 %v194
    %v298 = vunpack.c.l.b16 %v195
    %v299 = vunpack.c.l.b16 %v196
    %v300 = vunpack.c.l.b16 %v197
    %v301 = vunpack.c.l.b16 %v198
    %v302 = vunpack.c.l.b16 %v199
    %v303 = vunpack.c.l.b16 %v200
    %v304 = vunpack.c.l.b16 %v201
    %v305 = vunpack.c.l.b16 %v202
    %v306 = vunpack.c.l.b16 %v203
    %v307 = vunpack.c.l.b16 %v204
    %v308 = vunpack.c.l.b16 %v205
    %v309 = vunpack.c.l.b16 %v206
    %v310 = vunpack.c.l.b16 %v207
    %v311 = vunpack.c.l.b16 %v208
    %v312 = vunpack.c.l.b16 %v209
    %v313 = vpack.c.b16 %v266, %v265
    %v314 = vpack.c.b16 %v268, %v267
    %v315 = vpack.c.b16 %v270, %v269
    %v316 = vpack.c.b16 %v272, %v271
    %v317 = vpack.c.b16 %v274, %v273
    %v318 = vpack.c.b16 %v276, %v275
    %v319 = vpack.c.b16 %v278, %v277
    %v320 = vpack.c.b16 %v280, %v279
    %v321 = vpack.c.b16 %v282, %v281
    %v322 = vpack.c.b16 %v284, %v283
    %v323 = vpack.c.b16 %v286, %v285
    %v324 = vpack.c.b16 %v288, %v287
    %v325 = vpack.c.b16 %v290, %v289
    %v326 = vpack.c.b16 %v292, %v291
    %v327 = vpack.c.b16 %v294, %v293
    %v328 = vpack.c.b16 %v296, %v295
    %v329 = vpack.c.b16 %v298, %v297
    %v330 = vpack.c.b16 %v300, %v299
    %v331 = vpack.c.b16 %v302, %v301
    %v332 = vpack.c.b16 %v304, %v303
    %v333 = vpack.c.b16 %v306, %v305
    %v334 = vpack.c.b16 %v308, %v307
    %v335 = vpack.c.b16 %v310, %v309
    %v336 = vpack.c.b16 %v312, %v311
    %361 = vmatprep.subr.bf16.mxu0 0
    %362 = vmatpush1.bf16.msra.mxu0 %v313
    %363 = vmatprep.subr.bf16.mxu0 0
    %364 = vmatpush1.bf16.msra.mxu0 %v314
    %365 = vmatprep.subr.bf16.mxu0 0
    %366 = vmatpush1.bf16.msra.mxu0 %v315
    %367 = vmatprep.subr.bf16.mxu0 0
    %368 = vmatpush1.bf16.msra.mxu0 %v316
    %369 = vmatprep.subr.bf16.mxu0 0
    %370 = vmatpush1.bf16.msra.mxu0 %v317
    %371 = vmatprep.subr.bf16.mxu0 0
    %372 = vmatpush1.bf16.msra.mxu0 %v318
    %373 = vmatprep.subr.bf16.mxu0 0
    %374 = vmatpush1.bf16.msra.mxu0 %v319
    %375 = vmatprep.subr.bf16.mxu0 0
    %376 = vmatpush1.bf16.msra.mxu0 %v320
    %377 = vmatprep.subr.bf16.mxu0 0
    %378 = vmatpush1.bf16.msra.mxu0 %v321
    %379 = vmatprep.subr.bf16.mxu0 0
    %380 = vmatpush1.bf16.msra.mxu0 %v322
    %381 = vmatprep.subr.bf16.mxu0 0
    %382 = vmatpush1.bf16.msra.mxu0 %v323
    %383 = vmatprep.subr.bf16.mxu0 0
    %384 = vmatpush1.bf16.msra.mxu0 %v324
    %385 = vmatprep.subr.bf16.mxu0 0
    %386 = vmatpush1.bf16.msra.mxu0 %v325
    %387 = vmatprep.subr.bf16.mxu0 0
    %388 = vmatpush1.bf16.msra.mxu0 %v326
    %389 = vmatprep.subr.bf16.mxu0 0
    %390 = vmatpush1.bf16.msra.mxu0 %v327
    %391 = vmatprep.subr.bf16.mxu0 0
    %392 = vmatpush1.bf16.msra.mxu0 %v328
    %393 = vmatprep.mubr.bf16.mxu0 %v118
    %394 = vmatmul.mubr.bf16.gmra.mrb[0].mxu0 %v104
    %v395 = vpop.f32.mrb[0].mxu0
    %v396 = vadd.f32 %v215, %v395
    %v397 = vpop.f32.mrb[0].mxu0
    %v398 = vpop.f32.mrb[0].mxu0
    %v399 = vadd.f32 %v215, %v398
    %v400 = vpop.f32.mrb[0].mxu0
    %401 = vmatprep.mubr.bf16.mxu0 %v154
    %402 = vmatmul.mubr.bf16.gmra.mrb[0].mxu0 %v141
    %v403 = vpop.f32.mrb[0].mxu0
    %v404 = vadd.f32 %v215, %v403
    %v405 = vpop.f32.mrb[0].mxu0
    %v406 = vpop.f32.mrb[0].mxu0
    %v407 = vadd.f32 %v215, %v406
    %v408 = vpop.f32.mrb[0].mxu0
    %409 = vdwg.mxu0
    %410 = vmatprep.subr.bf16.mxu0 0
    %411 = vmatpush1.bf16.msra.mxu0 %v329
    %412 = vmatprep.subr.bf16.mxu0 0
    %413 = vmatpush1.bf16.msra.mxu0 %v330
    %414 = vmatprep.subr.bf16.mxu0 0
    %415 = vmatpush1.bf16.msra.mxu0 %v331
    %416 = vmatprep.subr.bf16.mxu0 0
    %417 = vmatpush1.bf16.msra.mxu0 %v332
    %418 = vmatprep.subr.bf16.mxu0 0
    %419 = vmatpush1.bf16.msra.mxu0 %v333
    %420 = vmatprep.subr.bf16.mxu0 0
    %421 = vmatpush1.bf16.msra.mxu0 %v334
    %422 = vmatprep.subr.bf16.mxu0 0
    %423 = vmatpush1.bf16.msra.mxu0 %v335
    %424 = vmatprep.subr.bf16.mxu0 0
    %425 = vmatpush1.bf16.msra.mxu0 %v336
    %426 = vmatprep.subr.bf16.mxu0 0
    %427 = vmatpush1.bf16.msra.mxu0 0
    %428 = vmatprep.subr.bf16.mxu0 0
    %429 = vmatpush1.bf16.msra.mxu0 0
    %430 = vmatprep.subr.bf16.mxu0 0
    %431 = vmatpush1.bf16.msra.mxu0 0
    %432 = vmatprep.subr.bf16.mxu0 0
    %433 = vmatpush1.bf16.msra.mxu0 0
    %434 = vmatprep.subr.bf16.mxu0 0
    %435 = vmatpush1.bf16.msra.mxu0 0
    %436 = vmatprep.subr.bf16.mxu0 0
    %437 = vmatpush1.bf16.msra.mxu0 0
    %438 = vmatprep.subr.bf16.mxu0 0
    %439 = vmatpush1.bf16.msra.mxu0 0
    %440 = vmatprep.subr.bf16.mxu0 0
    %441 = vmatpush1.bf16.msra.mxu0 0
    %442 = vmatprep.mubr.bf16.mxu0 0
    %443 = vmatmul.mubr.bf16.gmra.mrb[0].mxu0 %v125
    %v444 = vpop.f32.mrb[0].mxu0
    %v445 = vadd.f32 %v396, %v444
    %v446 = vpop.f32.mrb[0].mxu0
    %v447 = vpop.f32.mrb[0].mxu0
    %v448 = vadd.f32 %v399, %v447
    %v449 = vpop.f32.mrb[0].mxu0
    %450 = vmatprep.mubr.bf16.mxu0 0
    %451 = vmatmul.mubr.bf16.gmra.mrb[0].mxu0 %v160
    %v452 = vpop.f32.mrb[0].mxu0
    %v453 = vadd.f32 %v404, %v452
    %v454 = vpop.f32.mrb[0].mxu0
    %v455 = vpop.f32.mrb[0].mxu0
    %v456 = vadd.f32 %v407, %v455
    %v457 = vpop.f32.mrb[0].mxu0
    %458 = vdwg.mxu0
    %v459 = vmax.f32 %v445, 0.0
    %v460 = vmax.f32 %v448, 0.0
    %v461 = vmax.f32 %v453, 0.0
    %v462 = vmax.f32 %v456, 0.0
    %v463 = vpack.c.bf16 %v460, %v459
    %v464 = vpack.c.bf16 %v462, %v461
    %v466 = vshrl.u32 %v463, 16
    %v468 = vrot.slane %v466, 7
    %v469 = vshll.u32 %v463, 16
    %v471 = vor.u32 %v468, %v469
    %v474 = vsel %vm103, 0, %v471
    %v475 = vsel %vm103, %v468, 0
    %v477 = vshrl.u32 %v474, 16
    %v479 = vshll.u32 %v474, 16
    %v481 = vrot.slane %v479, 1
    %v482 = vor.u32 %v477, %v481
    %v484 = vshll.u32 %v475, 16
    %v486 = vrot.slane %v484, 1
    %v487 = vsel %vm106, %v482, %v486
    %v491 = vrot.slane %v474, 1
    %v492 = vrot.slane %v475, 1
    %v493 = vsel %vm122, %v491, %v492
    %v496 = vshrl.u32 %v464, 16
    %v498 = vrot.slane %v496, 7
    %v499 = vshll.u32 %v464, 16
    %v501 = vor.u32 %v498, %v499
    %v504 = vsel %vm103, 0, %v501
    %v505 = vsel %vm103, %v498, 0
    %v507 = vshrl.u32 %v504, 16
    %v509 = vshll.u32 %v504, 16
    %v511 = vrot.slane %v509, 1
    %v512 = vor.u32 %v507, %v511
    %v514 = vshll.u32 %v505, 16
    %v516 = vrot.slane %v514, 1
    %v517 = vsel %vm106, %v512, %v516
    %v521 = vrot.slane %v504, 1
    %v522 = vrot.slane %v505, 1
    %v523 = vsel %vm122, %v521, %v522
    %v525 = vld [vmem:[#allocation7] sm:$0xf]
    %v526 = vld [vmem:[#allocation7 + $0x4] sm:$0xf]
    %v527 = vld [vmem:[#allocation7 + $0x8] sm:$0xf]
    %v528 = vld [vmem:[#allocation7 + $0xc] sm:$0xf]
    %v529 = vld [vmem:[#allocation7 + $0x10] sm:$0xf]
    %v530 = vld [vmem:[#allocation7 + $0x14] sm:$0xf]
    %v531 = vld [vmem:[#allocation7 + $0x18] sm:$0xf]
    %v532 = vld [vmem:[#allocation7 + $0x1c] sm:$0xf]
    %v533 = vld [vmem:[#allocation7 + $0x20] sm:$0xf]
    %v534 = vld [vmem:[#allocation7 + $0x24] sm:$0xf]
    %v535 = vld [vmem:[#allocation7 + $0x28] sm:$0xf]
    %v536 = vld [vmem:[#allocation7 + $0x2c] sm:$0xf]
    %v537 = vld [vmem:[#allocation7 + $0x30] sm:$0xf]
    %v538 = vld [vmem:[#allocation7 + $0x34] sm:$0xf]
    %v539 = vld [vmem:[#allocation7 + $0x38] sm:$0xf]
    %v540 = vld [vmem:[#allocation7 + $0x3c] sm:$0xf]
    %v541 = vld [vmem:[#allocation7 + $0x40] sm:$0xf]
    %v542 = vld [vmem:[#allocation7 + $0x44] sm:$0xf]
    %v543 = vld [vmem:[#allocation7 + $0x48] sm:$0xf]
    %v544 = vld [vmem:[#allocation7 + $0x4c] sm:$0xf]
    %v545 = vld [vmem:[#allocation7 + $0x50] sm:$0xf]
    %v546 = vld [vmem:[#allocation7 + $0x54] sm:$0xf]
    %v547 = vld [vmem:[#allocation7 + $0x58] sm:$0xf]
    %v548 = vld [vmem:[#allocation7 + $0x5c] sm:$0xf]
    %v549 = vld [vmem:[#allocation7 + $0x60] sm:$0xf]
    %v550 = vld [vmem:[#allocation7 + $0x64] sm:$0xf]
    %v551 = vld [vmem:[#allocation7 + $0x68] sm:$0xf]
    %v552 = vld [vmem:[#allocation7 + $0x6c] sm:$0xf]
    %v553 = vld [vmem:[#allocation7 + $0x70] sm:$0xf]
    %v554 = vld [vmem:[#allocation7 + $0x74] sm:$0xf]
    %v555 = vld [vmem:[#allocation7 + $0x78] sm:$0xf]
    %v556 = vld [vmem:[#allocation7 + $0x7c] sm:$0xf]
    %v557 = vld [vmem:[#allocation7 + $0x80] sm:$0xf]
    %v558 = vld [vmem:[#allocation7 + $0x84] sm:$0xf]
    %v559 = vld [vmem:[#allocation7 + $0x88] sm:$0xf]
    %v560 = vld [vmem:[#allocation7 + $0x8c] sm:$0xf]
    %v561 = vld [vmem:[#allocation7 + $0x90] sm:$0xf]
    %v562 = vld [vmem:[#allocation7 + $0x94] sm:$0xf]
    %v563 = vld [vmem:[#allocation7 + $0x98] sm:$0xf]
    %v564 = vld [vmem:[#allocation7 + $0x9c] sm:$0xf]
    %v565 = vld [vmem:[#allocation7 + $0xa0] sm:$0xf]
    %v566 = vld [vmem:[#allocation7 + $0xa4] sm:$0xf]
    %v567 = vld [vmem:[#allocation7 + $0xa8] sm:$0xf]
    %v568 = vld [vmem:[#allocation7 + $0xac] sm:$0xf]
    %v569 = vld [vmem:[#allocation7 + $0xb0] sm:$0xf]
    %v570 = vld [vmem:[#allocation7 + $0xb4] sm:$0xf]
    %v571 = vld [vmem:[#allocation7 + $0xb8] sm:$0xf]
    %v572 = vld [vmem:[#allocation7 + $0xbc] sm:$0xf]
    %v573 = vld [vmem:[%s4] sm:$0x1]
    %v575 = vlaneseq
    %v576 = vshrl.u32 %v575, 7
    %v577 = vsub.s32 0, %v576
    %v578 = vrot.slane %v573, %v577
    %v628 = vunpack.c.l.b16 %v525
    %v629 = vunpack.c.l.b16 %v526
    %v630 = vunpack.c.l.b16 %v527
    %v631 = vunpack.c.l.b16 %v528
    %v632 = vunpack.c.l.b16 %v529
    %v633 = vunpack.c.l.b16 %v530
    %v634 = vunpack.c.l.b16 %v531
    %v635 = vunpack.c.l.b16 %v532
    %v636 = vunpack.c.l.b16 %v533
    %v637 = vunpack.c.l.b16 %v534
    %v638 = vunpack.c.l.b16 %v535
    %v639 = vunpack.c.l.b16 %v536
    %v640 = vunpack.c.l.b16 %v537
    %v641 = vunpack.c.l.b16 %v538
    %v642 = vunpack.c.l.b16 %v539
    %v643 = vunpack.c.l.b16 %v540
    %v644 = vunpack.c.l.b16 %v541
    %v645 = vunpack.c.l.b16 %v542
    %v646 = vunpack.c.l.b16 %v543
    %v647 = vunpack.c.l.b16 %v544
    %v648 = vunpack.c.l.b16 %v545
    %v649 = vunpack.c.l.b16 %v546
    %v650 = vunpack.c.l.b16 %v547
    %v651 = vunpack.c.l.b16 %v548
    %v652 = vunpack.c.l.b16 %v549
    %v653 = vunpack.c.l.b16 %v550
    %v654 = vunpack.c.l.b16 %v551
    %v655 = vunpack.c.l.b16 %v552
    %v656 = vunpack.c.l.b16 %v553
    %v657 = vunpack.c.l.b16 %v554
    %v658 = vunpack.c.l.b16 %v555
    %v659 = vunpack.c.l.b16 %v556
    %v660 = vunpack.c.l.b16 %v557
    %v661 = vunpack.c.l.b16 %v558
    %v662 = vunpack.c.l.b16 %v559
    %v663 = vunpack.c.l.b16 %v560
    %v664 = vunpack.c.l.b16 %v561
    %v665 = vunpack.c.l.b16 %v562
    %v666 = vunpack.c.l.b16 %v563
    %v667 = vunpack.c.l.b16 %v564
    %v668 = vunpack.c.l.b16 %v565
    %v669 = vunpack.c.l.b16 %v566
    %v670 = vunpack.c.l.b16 %v567
    %v671 = vunpack.c.l.b16 %v568
    %v672 = vunpack.c.l.b16 %v569
    %v673 = vunpack.c.l.b16 %v570
    %v674 = vunpack.c.l.b16 %v571
    %v675 = vunpack.c.l.b16 %v572
    %v676 = vpack.c.b16 %v629, %v628
    %v677 = vpack.c.b16 %v631, %v630
    %v678 = vpack.c.b16 %v633, %v632
    %v679 = vpack.c.b16 %v635, %v634
    %v680 = vpack.c.b16 %v637, %v636
    %v681 = vpack.c.b16 %v639, %v638
    %v682 = vpack.c.b16 %v641, %v640
    %v683 = vpack.c.b16 %v643, %v642
    %v684 = vpack.c.b16 %v645, %v644
    %v685 = vpack.c.b16 %v647, %v646
    %v686 = vpack.c.b16 %v649, %v648
    %v687 = vpack.c.b16 %v651, %v650
    %v688 = vpack.c.b16 %v653, %v652
    %v689 = vpack.c.b16 %v655, %v654
    %v690 = vpack.c.b16 %v657, %v656
    %v691 = vpack.c.b16 %v659, %v658
    %v692 = vpack.c.b16 %v661, %v660
    %v693 = vpack.c.b16 %v663, %v662
    %v694 = vpack.c.b16 %v665, %v664
    %v695 = vpack.c.b16 %v667, %v666
    %v696 = vpack.c.b16 %v669, %v668
    %v697 = vpack.c.b16 %v671, %v670
    %v698 = vpack.c.b16 %v673, %v672
    %v699 = vpack.c.b16 %v675, %v674
    %724 = vmatprep.subr.bf16.mxu0 0
    %725 = vmatpush1.bf16.msra.mxu0 %v676
    %726 = vmatprep.subr.bf16.mxu0 0
    %727 = vmatpush1.bf16.msra.mxu0 %v677
    %728 = vmatprep.subr.bf16.mxu0 0
    %729 = vmatpush1.bf16.msra.mxu0 %v678
    %730 = vmatprep.subr.bf16.mxu0 0
    %731 = vmatpush1.bf16.msra.mxu0 %v679
    %732 = vmatprep.subr.bf16.mxu0 0
    %733 = vmatpush1.bf16.msra.mxu0 %v680
    %734 = vmatprep.subr.bf16.mxu0 0
    %735 = vmatpush1.bf16.msra.mxu0 %v681
    %736 = vmatprep.subr.bf16.mxu0 0
    %737 = vmatpush1.bf16.msra.mxu0 %v682
    %738 = vmatprep.subr.bf16.mxu0 0
    %739 = vmatpush1.bf16.msra.mxu0 %v683
    %740 = vmatprep.subr.bf16.mxu0 0
    %741 = vmatpush1.bf16.msra.mxu0 %v684
    %742 = vmatprep.subr.bf16.mxu0 0
    %743 = vmatpush1.bf16.msra.mxu0 %v685
    %744 = vmatprep.subr.bf16.mxu0 0
    %745 = vmatpush1.bf16.msra.mxu0 %v686
    %746 = vmatprep.subr.bf16.mxu0 0
    %747 = vmatpush1.bf16.msra.mxu0 %v687
    %748 = vmatprep.subr.bf16.mxu0 0
    %749 = vmatpush1.bf16.msra.mxu0 %v688
    %750 = vmatprep.subr.bf16.mxu0 0
    %751 = vmatpush1.bf16.msra.mxu0 %v689
    %752 = vmatprep.subr.bf16.mxu0 0
    %753 = vmatpush1.bf16.msra.mxu0 %v690
    %754 = vmatprep.subr.bf16.mxu0 0
    %755 = vmatpush1.bf16.msra.mxu0 %v691
    %756 = vmatprep.mubr.bf16.mxu0 %v487
    %757 = vmatmul.mubr.bf16.gmra.mrb[0].mxu0 %v474
    %v758 = vpop.f32.mrb[0].mxu0
    %v759 = vadd.f32 %v578, %v758
    %v760 = vpop.f32.mrb[0].mxu0
    %v761 = vpop.f32.mrb[0].mxu0
    %v762 = vadd.f32 %v578, %v761
    %v763 = vpop.f32.mrb[0].mxu0
    %764 = vmatprep.mubr.bf16.mxu0 %v517
    %765 = vmatmul.mubr.bf16.gmra.mrb[0].mxu0 %v504
    %v766 = vpop.f32.mrb[0].mxu0
    %v767 = vadd.f32 %v578, %v766
    %v768 = vpop.f32.mrb[0].mxu0
    %v769 = vpop.f32.mrb[0].mxu0
    %v770 = vadd.f32 %v578, %v769
    %v771 = vpop.f32.mrb[0].mxu0
    %772 = vdwg.mxu0
    %773 = vmatprep.subr.bf16.mxu0 0
    %774 = vmatpush1.bf16.msra.mxu0 %v692
    %775 = vmatprep.subr.bf16.mxu0 0
    %776 = vmatpush1.bf16.msra.mxu0 %v693
    %777 = vmatprep.subr.bf16.mxu0 0
    %778 = vmatpush1.bf16.msra.mxu0 %v694
    %779 = vmatprep.subr.bf16.mxu0 0
    %780 = vmatpush1.bf16.msra.mxu0 %v695
    %781 = vmatprep.subr.bf16.mxu0 0
    %782 = vmatpush1.bf16.msra.mxu0 %v696
    %783 = vmatprep.subr.bf16.mxu0 0
    %784 = vmatpush1.bf16.msra.mxu0 %v697
    %785 = vmatprep.subr.bf16.mxu0 0
    %786 = vmatpush1.bf16.msra.mxu0 %v698
    %787 = vmatprep.subr.bf16.mxu0 0
    %788 = vmatpush1.bf16.msra.mxu0 %v699
    %789 = vmatprep.subr.bf16.mxu0 0
    %790 = vmatpush1.bf16.msra.mxu0 0
    %791 = vmatprep.subr.bf16.mxu0 0
    %792 = vmatpush1.bf16.msra.mxu0 0
    %793 = vmatprep.subr.bf16.mxu0 0
    %794 = vmatpush1.bf16.msra.mxu0 0
    %795 = vmatprep.subr.bf16.mxu0 0
    %796 = vmatpush1.bf16.msra.mxu0 0
    %797 = vmatprep.subr.bf16.mxu0 0
    %798 = vmatpush1.bf16.msra.mxu0 0
    %799 = vmatprep.subr.bf16.mxu0 0
    %800 = vmatpush1.bf16.msra.mxu0 0
    %801 = vmatprep.subr.bf16.mxu0 0
    %802 = vmatpush1.bf16.msra.mxu0 0
    %803 = vmatprep.subr.bf16.mxu0 0
    %804 = vmatpush1.bf16.msra.mxu0 0
    %805 = vmatprep.mubr.bf16.mxu0 0
    %806 = vmatmul.mubr.bf16.gmra.mrb[0].mxu0 %v493
    %v807 = vpop.f32.mrb[0].mxu0
    %v808 = vadd.f32 %v759, %v807
    %v809 = vpop.f32.mrb[0].mxu0
    %v810 = vpop.f32.mrb[0].mxu0
    %v811 = vadd.f32 %v762, %v810
    %v812 = vpop.f32.mrb[0].mxu0
    %813 = vmatprep.mubr.bf16.mxu0 0
    %814 = vmatmul.mubr.bf16.gmra.mrb[0].mxu0 %v523
    %v815 = vpop.f32.mrb[0].mxu0
    %v816 = vadd.f32 %v767, %v815
    %v817 = vpop.f32.mrb[0].mxu0
    %v818 = vpop.f32.mrb[0].mxu0
    %v819 = vadd.f32 %v770, %v818
    %v820 = vpop.f32.mrb[0].mxu0
    %821 = vdwg.mxu0
    %v822 = vmax.f32 %v808, 0.0
    %v823 = vmax.f32 %v811, 0.0
    %v824 = vmax.f32 %v816, 0.0
    %v825 = vmax.f32 %v819, 0.0
    %v826 = vpack.c.bf16 %v823, %v822
    %v827 = vpack.c.bf16 %v825, %v824
    %v828 = vld [vmem:[#allocation8] sm:$0xf]
    %v829 = vld [vmem:[#allocation8 + $0x4] sm:$0xf]
    %v830 = vld [vmem:[#allocation8 + $0x8] sm:$0xf]
    %v831 = vld [vmem:[#allocation8 + $0xc] sm:$0xf]
    %v832 = vld [vmem:[#allocation8 + $0x10] sm:$0xf]
    %v833 = vld [vmem:[#allocation8 + $0x14] sm:$0xf]
    %v834 = vld [vmem:[#allocation8 + $0x18] sm:$0xf]
    %v835 = vld [vmem:[#allocation8 + $0x1c] sm:$0xf]
    %v836 = vld [vmem:[#allocation8 + $0x20] sm:$0xf]
    %v837 = vld [vmem:[#allocation8 + $0x24] sm:$0xf]
    %v838 = vld [vmem:[#allocation8 + $0x28] sm:$0xf]
    %v839 = vld [vmem:[#allocation8 + $0x2c] sm:$0xf]
    %v840 = vld [vmem:[#allocation8 + $0x30] sm:$0xf]
    %v841 = vld [vmem:[#allocation8 + $0x34] sm:$0xf]
    %v842 = vld [vmem:[#allocation8 + $0x38] sm:$0xf]
    %v843 = vld [vmem:[#allocation8 + $0x3c] sm:$0xf]
    %v844 = vld [vmem:[%s6] sm:$0x1]
    %v846 = vlaneseq
    %v847 = vshrl.u32 %v846, 7
    %v848 = vsub.s32 0, %v847
    %v849 = vrot.slane %v844, %v848
    %v867 = vunpack.c.l.b16 %v828
    %v868 = vunpack.c.l.b16 %v829
    %v869 = vunpack.c.l.b16 %v830
    %v870 = vunpack.c.l.b16 %v831
    %v871 = vunpack.c.l.b16 %v832
    %v872 = vunpack.c.l.b16 %v833
    %v873 = vunpack.c.l.b16 %v834
    %v874 = vunpack.c.l.b16 %v835
    %v875 = vunpack.c.l.b16 %v836
    %v876 = vunpack.c.l.b16 %v837
    %v877 = vunpack.c.l.b16 %v838
    %v878 = vunpack.c.l.b16 %v839
    %v879 = vunpack.c.l.b16 %v840
    %v880 = vunpack.c.l.b16 %v841
    %v881 = vunpack.c.l.b16 %v842
    %v882 = vunpack.c.l.b16 %v843
    %v883 = vpack.c.b16 %v868, %v867
    %v884 = vpack.c.b16 %v870, %v869
    %v885 = vpack.c.b16 %v872, %v871
    %v886 = vpack.c.b16 %v874, %v873
    %v887 = vpack.c.b16 %v876, %v875
    %v888 = vpack.c.b16 %v878, %v877
    %v889 = vpack.c.b16 %v880, %v879
    %v890 = vpack.c.b16 %v882, %v881
    %899 = vmatprep.subr.bf16.mxu0 0
    %900 = vmatpush1.bf16.msra.mxu0 %v883
    %901 = vmatprep.subr.bf16.mxu0 0
    %902 = vmatpush1.bf16.msra.mxu0 %v884
    %903 = vmatprep.subr.bf16.mxu0 0
    %904 = vmatpush1.bf16.msra.mxu0 %v885
    %905 = vmatprep.subr.bf16.mxu0 0
    %906 = vmatpush1.bf16.msra.mxu0 %v886
    %907 = vmatprep.subr.bf16.mxu0 0
    %908 = vmatpush1.bf16.msra.mxu0 %v887
    %909 = vmatprep.subr.bf16.mxu0 0
    %910 = vmatpush1.bf16.msra.mxu0 %v888
    %911 = vmatprep.subr.bf16.mxu0 0
    %912 = vmatpush1.bf16.msra.mxu0 %v889
    %913 = vmatprep.subr.bf16.mxu0 0
    %914 = vmatpush1.bf16.msra.mxu0 %v890
    %915 = vmatprep.subr.bf16.mxu0 0
    %916 = vmatpush1.bf16.msra.mxu0 0
    %917 = vmatprep.subr.bf16.mxu0 0
    %918 = vmatpush1.bf16.msra.mxu0 0
    %919 = vmatprep.subr.bf16.mxu0 0
    %920 = vmatpush1.bf16.msra.mxu0 0
    %921 = vmatprep.subr.bf16.mxu0 0
    %922 = vmatpush1.bf16.msra.mxu0 0
    %923 = vmatprep.subr.bf16.mxu0 0
    %924 = vmatpush1.bf16.msra.mxu0 0
    %925 = vmatprep.subr.bf16.mxu0 0
    %926 = vmatpush1.bf16.msra.mxu0 0
    %927 = vmatprep.subr.bf16.mxu0 0
    %928 = vmatpush1.bf16.msra.mxu0 0
    %929 = vmatprep.subr.bf16.mxu0 0
    %930 = vmatpush1.bf16.msra.mxu0 0
    %931 = vmatprep.mubr.bf16.mxu0 0
    %932 = vmatmul.mubr.bf16.gmra.mrb[0].mxu0 %v826
    %v933 = vpop.f32.mrb[0].mxu0
    %v934 = vadd.f32 %v849, %v933
    %v935 = vpop.f32.mrb[0].mxu0
    %v936 = vpop.f32.mrb[0].mxu0
    %v937 = vadd.f32 %v849, %v936
    %v938 = vpop.f32.mrb[0].mxu0
    %939 = vmatprep.mubr.bf16.mxu0 0
    %940 = vmatmul.mubr.bf16.gmra.mrb[0].mxu0 %v827
    %v941 = vpop.f32.mrb[0].mxu0
    %v942 = vadd.f32 %v849, %v941
    %v943 = vpop.f32.mrb[0].mxu0
    %v944 = vpop.f32.mrb[0].mxu0
    %v945 = vadd.f32 %v849, %v944
    %v946 = vpop.f32.mrb[0].mxu0
    %947 = vdwg.mxu0
    %948 = vst [vmem:[#allocation10] sm:$0xff] %v934
    %949 = vst [vmem:[#allocation10 + $0x8] sm:$0xff] %v937
    %950 = vst [vmem:[#allocation10 + $0x10] sm:$0xff] %v942
    %951 = vst [vmem:[#allocation10 + $0x18] sm:$0xff] %v945
    // Predicated region
    $region46: #{tpu_custom_call.1} parent=1 // pred_check
      _
    $region47: #{tpu_custom_call.1} parent=1 // pred_check_branch
      %953 = sbr.rel (0) target = $region49
    $region48: #{tpu_custom_call.1} parent=1 // pred_region
      %s955 = ssub.s32 512, 512
      %956 = vsyncadd [#allocation4], %s955
      %s957 = sshll.u32 [#allocation10], 4
      %s958 = int_to_ptr.vmem [resolvable:$true] %s957
      %963 = dma.vmem_to_hbm [thread:$0]  %s958, 512, %s7, [#allocation4], 128, 128, 8
    $region49: #{tpu_custom_call.1} parent=1 // pred_fallthru
      _
    // Predicated region
    $region50: #{tpu_custom_call.1} parent=1 // pred_check
      _
    $region51: #{tpu_custom_call.1} parent=1 // pred_check_branch
      %965 = sbr.rel (0) target = $region53
    $region52: #{tpu_custom_call.1} parent=1 // pred_region
      %966 = dma.done [#allocation4], 512
    $region53: #{tpu_custom_call.1} parent=1 // pred_fallthru
      _
    %967 = vsyncpa [#allocation3], 1
    %968 = vsyncpa [#allocation6], 1
    %969 = vsyncpa [#allocation9], 1
    %970 = vsyncpa [#allocation4], 1

</llo_original>
